<compile_context>
chip_gen: v5e
topology: v5e:2x2
jax: 0.10.0
libtpu: 0.0.40
codegen_flags: <defaults>
</compile_context>

<pallas_src>
import jax
import jax.numpy as jnp
from jax.experimental import pallas as pl
from jax.experimental.pallas import tpu as pltpu

_LANE = 128  # TPU vreg lane width


def _cpa_head2_kernel(x_ref, w_ref, o_ref):
    # x_ref: (B, 3*D)      f32 fused input (chunk axis folded into K)
    # w_ref: (3*D, O_pad)  bf16 fused, lane-padded weight
    # o_ref: (B, O_pad)    f32 lane-dense output
    x = x_ref[...].astype(w_ref.dtype)  # bf16 operands -> single-pass MXU
    o_ref[...] = jnp.dot(
        x, w_ref[...], preferred_element_type=jnp.float32
    ).astype(o_ref.dtype)


def prepare_cpa_head2_weights(wA, wB, wC, *, compute_dtype=jnp.bfloat16):
    """ONE-TIME weight prep (do this at init, not per forward).

    PyTorch-style (O, D) weights -> fused, lane-padded (3*D, O_pad) matrix,
    cast to the MXU compute dtype. Returns (w_fused, O).
    """
    O, D = wA.shape
    assert wB.shape == (O, D) and wC.shape == (O, D)
    w = jnp.concatenate([wA.T, wB.T, wC.T], axis=0)          # (3D, O)
    O_pad = max(_LANE, pl.cdiv(O, _LANE) * _LANE)             # lane-dense N
    if O_pad != O:
        w = jnp.pad(w, ((0, 0), (0, O_pad - O)))              # exact zero cols
    return w.astype(compute_dtype), O


def cpa_task_head2(x, w_fused):
    """x: (B, 3, D).  w_fused: (3*D, O_pad) from prepare_cpa_head2_weights.

    Returns y_pad: (B, O_pad) f32 where y_pad[:, :O] == x1@A.w^T + x2@B.w^T
    + x3@C.w^T and the remaining columns are exactly zero.
    """
    B, n_chunks, D = x.shape
    assert n_chunks == 3
    K, O_pad = w_fused.shape
    assert K == n_chunks * D

    # Contiguous merge of (3, D) -> (3D,): free layout plumbing.
    x_flat = x.reshape(B, K)

    return pl.pallas_call(
        _cpa_head2_kernel,
        out_shape=jax.ShapeDtypeStruct((B, O_pad), jnp.float32),
        # No grid: whole arrays land in VMEM, single kernel invocation,
        # no pipeline prologue/epilogue, no double-buffering.
        in_specs=[
            pl.BlockSpec(memory_space=pltpu.MemorySpace.VMEM),
            pl.BlockSpec(memory_space=pltpu.MemorySpace.VMEM),
        ],
        out_specs=pl.BlockSpec(memory_space=pltpu.MemorySpace.VMEM),
    )(x_flat, w_fused)


if __name__ == "__main__":
    # Small shapes implied by the module: batch=8, input_size=32, output_size=16.
    B, D, O = 8, 32, 16

    key = jax.random.PRNGKey(0)
    kx, ka, kb, kc = jax.random.split(key, 4)

    x = jax.random.normal(kx, (B, 3, D), dtype=jnp.float32)

    # Deterministic "nn.Linear(bias=False)"-style weights, PyTorch shape (O, D).
    bound = 1.0 / jnp.sqrt(D)
    wA = jax.random.uniform(ka, (O, D), jnp.float32, -bound, bound)
    wB = jax.random.uniform(kb, (O, D), jnp.float32, -bound, bound)
    wC = jax.random.uniform(kc, (O, D), jnp.float32, -bound, bound)

    # One-time init-side prep (transpose + fuse + pad + bf16 cast).
    w_fused, out_features = prepare_cpa_head2_weights(wA, wB, wC)
    w_fused = jax.block_until_ready(w_fused)

    # Per-call path: just the fused matmul kernel.
    head = jax.jit(cpa_task_head2)
    y_pad = jax.block_until_ready(head(x, w_fused))

    # Pure-JAX f32 reference; slice off the padded columns only for comparison
    # (a real consumer can take the padded tensor directly).
    y = y_pad[:, :out_features]
    y_ref = x[:, 0] @ wA.T + x[:, 1] @ wB.T + x[:, 2] @ wC.T

    assert y_pad.shape == (B, _LANE)
    assert y.shape == (B, O)
    # bf16 MXU operands -> loosen tolerance vs the f32 reference.
    assert jnp.allclose(y, y_ref, atol=5e-2, rtol=5e-2), "mismatch vs reference"
    # Padded columns must be exactly zero.
    assert jnp.all(y_pad[:, out_features:] == 0.0), "padded columns not zero"

    print("KERNEL_OK")
</pallas_src>

<mosaic_0001>
module attributes {stable_mosaic.version = 11 : i64} {
  func.func @_cpa_head2_kernel(%arg0: memref<8x96xf32, #tpu.memory_space<vmem>>, %arg1: memref<96x128xbf16, #tpu.memory_space<vmem>>, %arg2: memref<8x128xf32, #tpu.memory_space<vmem>>) attributes {dimension_semantics = [], scalar_prefetch = 0 : i64, scratch_operands = 0 : i64, tpu.core_type = #tpu.core_type<tc>} {
    %c0 = arith.constant 0 : index
    %c0_0 = arith.constant 0 : index
    %0 = vector.load %arg0[%c0, %c0_0] : memref<8x96xf32, #tpu.memory_space<vmem>>, vector<8x96xf32>
    %1 = arith.truncf %0 : vector<8x96xf32> to vector<8x96xbf16>
    %c0_1 = arith.constant 0 : index
    %c0_2 = arith.constant 0 : index
    %2 = vector.load %arg1[%c0_1, %c0_2] : memref<96x128xbf16, #tpu.memory_space<vmem>>, vector<96x128xbf16>
    %cst = arith.constant dense<0.000000e+00> : vector<8x128xf32>
    %3 = tpu.matmul %1, %2, %cst {dimension_numbers = #tpu.dot_dimension_numbers<[1], [0], [0], [1], [0, 0, 1, 1], [], []>} : vector<8x96xbf16>, vector<96x128xbf16>, vector<8x128xf32> -> vector<8x128xf32>
    %c0_3 = arith.constant 0 : index
    %c0_4 = arith.constant 0 : index
    %4 = vector.load %arg2[%c0_3, %c0_4] : memref<8x128xf32, #tpu.memory_space<vmem>>, vector<8x128xf32>
    tpu.vector_store %arg2[%c0_3, %c0_4], %3 {strides = array<i32>} : memref<8x128xf32, #tpu.memory_space<vmem>>, vector<8x128xf32>,
    return
  }
}

</mosaic_0001>

<llo_original>
// kernel: cpa_task_head2.1
$region0: #{cpa_task_head2.1}
  #allocation0 [shape = 'u32[]', space=smem, size = 0x4, offset = 0x4, fixed_abs, tag = 'smem constant byte address 0x4 - core index']
  #allocation1 [shape = 'u32[72,128]{1,0:T(1,128)}', space=vmem, size = 0x9000, scoped, tag = 'internal scratch']
  %s0 = inlined_call_operand.vmem [shape: f32[8,96], index: 0, kind: input, shape index: {}]
  %s1 = inlined_call_operand.vmem [shape: bf16[96,128], index: 1, kind: input, shape index: {}]
  %s2 = inlined_call_operand.hbm [shape: f32[8,128], index: 2, kind: output, shape index: {}]
  %s3 = sld [smem:[#allocation0]]
  $region18: #{cpa_task_head2.1} parent=0
    _
  %s5 = ssub.s32 1, %s3
  %s6 = scalar_select 0, %s5, %s3
  $region1: #{cpa_task_head2.1} parent=0
    #allocation2 [shape = 'u8[4096]{0}', space=vmem, size = 0x1000, scoped, tag = 'output window, operand 0, single buffered']
    #allocation3 [shape = 's32[1]{0}', space=sflag, size = 0x4, scoped, tag = 'scoped memory for cpa_task_head2.1']
    %7 = vsyncpa [#allocation3], 0
    // Predicated region
    $region2: #{cpa_task_head2.1} parent=1 // pred_check
      _
    $region3: #{cpa_task_head2.1} parent=1 // pred_check_branch
      %9 = sbr.rel (0) target = $region5
    $region4: #{cpa_task_head2.1} parent=1 // pred_region
      _
    $region5: #{cpa_task_head2.1} parent=1 // pred_fallthru
      _
    // Predicated region
    $region6: #{cpa_task_head2.1} parent=1 // pred_check
      _
    $region7: #{cpa_task_head2.1} parent=1 // pred_check_branch
      %11 = sbr.rel (0) target = $region9
    $region8: #{cpa_task_head2.1} parent=1 // pred_region
      _
    $region9: #{cpa_task_head2.1} parent=1 // pred_fallthru
      _
    %v13 = vld [vmem:[%s0] sm:$0xff]
    %v14 = vpack.c.bf16 %v13, %v13
    %v15 = vld [vmem:[%s1] sm:$0xf]
    %v16 = vld [vmem:[%s1 + $0x4] sm:$0xf]
    %v17 = vld [vmem:[%s1 + $0x8] sm:$0xf]
    %v18 = vld [vmem:[%s1 + $0xc] sm:$0xf]
    %v19 = vld [vmem:[%s1 + $0x10] sm:$0xf]
    %v20 = vld [vmem:[%s1 + $0x14] sm:$0xf]
    %v21 = vld [vmem:[%s1 + $0x18] sm:$0xf]
    %v22 = vld [vmem:[%s1 + $0x1c] sm:$0xf]
    %v23 = vld [vmem:[%s1 + $0x20] sm:$0xf]
    %v24 = vld [vmem:[%s1 + $0x24] sm:$0xf]
    %v25 = vld [vmem:[%s1 + $0x28] sm:$0xf]
    %v26 = vld [vmem:[%s1 + $0x2c] sm:$0xf]
    %v39 = vunpack.c.l.b16 %v15
    %v40 = vunpack.c.l.b16 %v16
    %v41 = vunpack.c.l.b16 %v17
    %v42 = vunpack.c.l.b16 %v18
    %v43 = vunpack.c.l.b16 %v19
    %v44 = vunpack.c.l.b16 %v20
    %v45 = vunpack.c.l.b16 %v21
    %v46 = vunpack.c.l.b16 %v22
    %v47 = vunpack.c.l.b16 %v23
    %v48 = vunpack.c.l.b16 %v24
    %v49 = vunpack.c.l.b16 %v25
    %v50 = vunpack.c.l.b16 %v26
    %v51 = vpack.c.b16 %v40, %v39
    %v52 = vpack.c.b16 %v42, %v41
    %v53 = vpack.c.b16 %v44, %v43
    %v54 = vpack.c.b16 %v46, %v45
    %v55 = vpack.c.b16 %v48, %v47
    %v56 = vpack.c.b16 %v50, %v49
    %vm63 = vcmask 785408
    %v65 = vsel %vm63, %v14, 0
    %67 = vmatpush.bf16.msra.mxu0 0
    %68 = vmatpush.bf16.msra.mxu0 0
    %69 = vmatpush.bf16.msra.mxu0 %v56
    %70 = vmatpush.bf16.msra.mxu0 %v55
    %71 = vmatpush.bf16.msra.mxu0 %v54
    %72 = vmatpush.bf16.msra.mxu0 %v53
    %73 = vmatpush.bf16.msra.mxu0 %v52
    %74 = vmatpush.bf16.msra.mxu0 %v51
    %75 = vmatmul.bf16.gmra.mxu0 %v65
    %v76 = vpop.f32.mrf.mxu0
    %v77 = vadd.f32 0.0, %v76
    %v78 = vpop.f32.mrf.mxu0
    %79 = vdwg.mxu0
    %80 = vst [vmem:[#allocation2] sm:$0xff] %v77
    // Predicated region
    $region10: #{cpa_task_head2.1} parent=1 // pred_check
      _
    $region11: #{cpa_task_head2.1} parent=1 // pred_check_branch
      %82 = sbr.rel (0) target = $region13
    $region12: #{cpa_task_head2.1} parent=1 // pred_region
      %84 = vsyncadd [#allocation3], 0
      %s86 = sshll.u32 [#allocation2], 4
      %s87 = int_to_ptr.vmem [resolvable:$true] %s86
      %s88 = sshll.u32 %s2, 4
      %s89 = int_to_ptr.hbm [resolvable:$true] %s88
      %91 = dma.vmem_to_hbm [thread:$0]  %s87, 128, %s89, [#allocation3]
    $region13: #{cpa_task_head2.1} parent=1 // pred_fallthru
      _
    // Predicated region
    $region14: #{cpa_task_head2.1} parent=1 // pred_check
      _
    $region15: #{cpa_task_head2.1} parent=1 // pred_check_branch
      %93 = sbr.rel (0) target = $region17
    $region16: #{cpa_task_head2.1} parent=1 // pred_region
      %95 = dma.done [#allocation3], 128
    $region17: #{cpa_task_head2.1} parent=1 // pred_fallthru
      _
    %96 = vsyncpa [#allocation3], 1

</llo_original>
